<compile_context>
chip_gen: v7x
topology: tpu7x:2x2x1
jax: 0.10.0
libtpu: 0.0.40
codegen_flags: <defaults>
</compile_context>

<pallas_src>
import math
from functools import partial

import jax
import jax.numpy as jnp
from jax import lax
from jax.experimental import pallas as pl
from jax.experimental.pallas import tpu as pltpu


_MIN_VMEM = 32 * 1024 * 1024
_MAX_VMEM = 64 * 1024 * 1024   # stay under v7x's 64 MiB physical VMEM


def _vmem_limit(est_bytes):
    return int(min(_MAX_VMEM, max(_MIN_VMEM, est_bytes)))


# ----------------------------------------------------------------------------
# Fused edge-conv kernel: 1x1 conv + InstanceNorm2d + leaky_relu(0.2) + max_k
# ----------------------------------------------------------------------------
def _edgeconv_kernel(num_k, x_ref, w_ref, o_ref):
    # x_ref: (1, Cin, num_k*N), neighbor-major flattening (k, n) -> k*N + n
    # w_ref: (Cout, Cin); o_ref: (1, Cout, N)
    x = x_ref[0]
    w = w_ref[...]
    # 1x1 conv == matmul; bf16 operands, f32 accumulation on the MXU.
    y = jnp.dot(w.astype(jnp.bfloat16), x.astype(jnp.bfloat16),
                preferred_element_type=jnp.float32)            # (Cout, K*N)
    # InstanceNorm2d: biased variance over the whole (N, K) spatial extent.
    mean = jnp.mean(y, axis=-1, keepdims=True)
    d = y - mean
    var = jnp.mean(d * d, axis=-1, keepdims=True)
    z = d * lax.rsqrt(var + 1e-5)
    # leaky_relu(0.2)
    z = jnp.where(z >= 0, z, 0.2 * z)
    # max over the k neighbors: k-major layout -> k lane-dense (Cout, N) slices
    n = o_ref.shape[-1]
    out = z[:, 0:n]
    for j in range(1, num_k):
        out = jnp.maximum(out, z[:, j * n:(j + 1) * n])
    o_ref[0] = out                                              # (Cout, N)


def edgeconv_fused_pallas(x_flat, w, num_k):
    """Fused conv1x1 + InstanceNorm + leaky_relu + max over k.

    x_flat: (B, Cin, num_k*N)   w: (Cout, Cin)   ->   (B, Cout, N)
    """
    B, Cin, KN = x_flat.shape
    N = KN // num_k
    Cout = w.shape[0]
    est = 4 * (Cin * KN + Cout * KN + Cout * N) * 4 + Cout * Cin * 8 + (4 << 20)
    return pl.pallas_call(
        partial(_edgeconv_kernel, num_k),
        out_shape=jax.ShapeDtypeStruct((B, Cout, N), jnp.float32),
        grid=(B,),
        in_specs=[pl.BlockSpec((1, Cin, KN), lambda i: (i, 0, 0)),
                  pl.BlockSpec((Cout, Cin), lambda i: (0, 0))],
        out_specs=pl.BlockSpec((1, Cout, N), lambda i: (i, 0, 0)),
        compiler_params=pltpu.CompilerParams(
            dimension_semantics=("parallel",),
            vmem_limit_bytes=_vmem_limit(est)),
    )(x_flat, w)


# ----------------------------------------------------------------------------
# Row-tiled linear: y = x @ W^T + b on flat rows (batch folded into rows)
# ----------------------------------------------------------------------------
def _linear_kernel(x_ref, w_ref, b_ref, o_ref):
    y = lax.dot_general(x_ref[...].astype(jnp.bfloat16),
                        w_ref[...].astype(jnp.bfloat16),
                        (((1,), (1,)), ((), ())),
                        preferred_element_type=jnp.float32)
    o_ref[...] = y + b_ref[...]


def linear_rows_pallas(x, w, b, row_tile=512):
    R, Cin = x.shape
    Cout = w.shape[0]
    tl = min(row_tile, R)
    return pl.pallas_call(
        _linear_kernel,
        out_shape=jax.ShapeDtypeStruct((R, Cout), jnp.float32),
        grid=(pl.cdiv(R, tl),),
        in_specs=[pl.BlockSpec((tl, Cin), lambda i: (i, 0)),
                  pl.BlockSpec((Cout, Cin), lambda i: (0, 0)),
                  pl.BlockSpec((1, Cout), lambda i: (0, 0))],
        out_specs=pl.BlockSpec((tl, Cout), lambda i: (i, 0)),
        compiler_params=pltpu.CompilerParams(
            dimension_semantics=("parallel",)),
    )(x, w, b)


# ----------------------------------------------------------------------------
# Fused attention block: QKV + MHA (rel-pos) + proj2 + residual + LayerNorm
# ----------------------------------------------------------------------------
def _attn_block_kernel(num_heads, x_ref, p_ref, wq_ref, bq_ref, wk_ref, bk_ref,
                       wv_ref, bv_ref, w2_ref, b2_ref, g_ref, bt_ref, o_ref):
    # x_ref: (1, C, N) channel-first x3 (read once); p_ref: (1, C, N, M).
    xT = x_ref[0]                        # (C, N)
    C, N = xT.shape
    H = num_heads
    dph = C // H
    scale = 1.0 / float(dph) ** 0.5

    x = xT.T                             # (N, C) row-major for the projections
    xb = x.astype(jnp.bfloat16)

    def proj(w_r, b_r):                  # y = x @ W^T + b, f32 accumulation
        return lax.dot_general(xb, w_r[...].astype(jnp.bfloat16),
                               (((1,), (1,)), ((), ())),
                               preferred_element_type=jnp.float32) + b_r[...]

    q = proj(wq_ref, bq_ref)             # (N, C)
    k = proj(wk_ref, bk_ref)
    v = proj(wv_ref, bv_ref)
    qT = q.T                             # (C, N), for the rel-pos contraction
    w2 = w2_ref[...]                     # (C, C)

    x4 = jnp.zeros((N, C), jnp.float32)  # proj2(hidden), accumulated per head
    for h in range(H):                   # static unroll (H = 4)
        lo, hi = h * dph, (h + 1) * dph
        q_h = q[:, lo:hi].astype(jnp.bfloat16)                   # (N, dph)
        k_h = k[:, lo:hi].astype(jnp.bfloat16)
        v_h = v[:, lo:hi].astype(jnp.bfloat16)
        # dot-product scores q_h @ k_h^T
        se = lax.dot_general(q_h, k_h, (((1,), (1,)), ((), ())),
                             preferred_element_type=jnp.float32)  # (N, M)
        # rel-pos scores: sum_c q[n,c] * p[c,n,m] over this head's channels.
        # Only the (dph, N, M) slab of p is pulled from the ref; no q-broadcast
        # and no full C x N x M product is ever materialized.
        p_h = p_ref[0, lo:hi, :, :]                               # (dph, N, M)
        sp = jnp.sum(p_h * qT[lo:hi][:, :, None], axis=0)         # (N, M)
        s = (se + sp) * scale
        s = s - jnp.max(s, axis=-1, keepdims=True)
        e = jnp.exp(s)
        attn = e * pl.reciprocal(jnp.sum(e, axis=-1, keepdims=True), approx=True)
        hh = lax.dot_general(attn.astype(jnp.bfloat16), v_h,
                             (((1,), (0,)), ((), ())),
                             preferred_element_type=jnp.float32)  # (N, dph)
        # fold this head's slice of proj2: hh @ W2[:, lo:hi]^T
        x4 = x4 + lax.dot_general(hh.astype(jnp.bfloat16),
                                  w2[:, lo:hi].astype(jnp.bfloat16),
                                  (((1,), (1,)), ((), ())),
                                  preferred_element_type=jnp.float32)

    # residual + LayerNorm over channels (f32 throughout)
    y = x + x4 + b2_ref[...]
    mu = jnp.mean(y, axis=-1, keepdims=True)
    d = y - mu
    var = jnp.mean(d * d, axis=-1, keepdims=True)
    yn = d * lax.rsqrt(var + 1e-5) * g_ref[...] + bt_ref[...]
    o_ref[0] = yn.T                      # (C, N): lane-dense output


def attn_block_pallas(x3, p, params, num_heads):
    # x3: (B, C, N); p: (B, C, N, N) -> (B, C, N)
    # NOTE: for large N, a grid axis over the key/M dimension with online-softmax
    # accumulators (p block (1, C, N, tile_m)) keeps the footprint under v7x's
    # 64 MiB VMEM; at the shapes exercised here a single (C, N, N) block fits.
    B, C, N = x3.shape
    est = 2 * (C * N * N * 4) + 8 * N * C * 4 + 16 * C * C * 4 + (4 << 20)
    kern = partial(_attn_block_kernel, num_heads)
    wspec = pl.BlockSpec((C, C), lambda i: (0, 0))
    vspec = pl.BlockSpec((1, C), lambda i: (0, 0))
    return pl.pallas_call(
        kern,
        out_shape=jax.ShapeDtypeStruct((B, C, N), jnp.float32),
        grid=(B,),
        in_specs=[
            pl.BlockSpec((1, C, N), lambda i: (i, 0, 0)),        # x3
            pl.BlockSpec((1, C, N, N), lambda i: (i, 0, 0, 0)),  # rel-pos p
            wspec, vspec,                                        # Wq, bq
            wspec, vspec,                                        # Wk, bk
            wspec, vspec,                                        # Wv, bv
            wspec, vspec,                                        # W2, b2
            vspec, vspec,                                        # LN gamma, beta
        ],
        out_specs=pl.BlockSpec((1, C, N), lambda i: (i, 0, 0)),
        compiler_params=pltpu.CompilerParams(
            dimension_semantics=("parallel",),
            vmem_limit_bytes=_vmem_limit(est)),
    )(x3, p, params["wq"], params["bq"], params["wk"], params["bk"],
      params["wv"], params["bv"], params["w2"], params["b2"],
      params["ln_g"], params["ln_b"])


# ----------------------------------------------------------------------------
# Plain-JAX glue (kNN, gathers, angular / sinusoidal embedding)
# ----------------------------------------------------------------------------
def square_distance_jax(src, dst):
    dist = -2.0 * jnp.einsum("bnc,bmc->bnm", src, dst)
    dist = dist + jnp.sum(src ** 2, axis=-1)[:, :, None]
    dist = dist + jnp.sum(dst ** 2, axis=-1)[:, None, :]
    return jnp.clip(dist, 1e-12, None)


def graph_feature_kmajor(feats, idx):
    # feats: (B, C, N), idx: (B, N, k) -> (B, 2C, k, N)   (neighbor-major)
    B, C, N = feats.shape
    kk = idx.shape[-1]
    idx_t = jnp.transpose(idx, (0, 2, 1))                          # (B, k, N)
    neighbor = jax.vmap(lambda f, i: f[:, i])(feats, idx_t)        # (B, C, k, N)
    center = jnp.broadcast_to(feats[:, :, None, :], (B, C, kk, N))
    return jnp.concatenate([center, neighbor - center], axis=1)


def angular_embedding(coords_t, idx, angular_factor):
    # coords_t: (B, N, 2), idx: (B, N, k) -> (B, N, N, k)
    knn_coords = jax.vmap(lambda ct, i: ct[i])(coords_t, idx)      # (B, N, k, 2)
    ref_vec = knn_coords - coords_t[:, :, None, :]                 # (B, N, k, 2)
    anc_vec = coords_t[:, None, :, :] - coords_t[:, :, None, :]    # (B, N, N, 2)
    ref_e = ref_vec[:, :, None, :, :]                              # (B, N, 1, k, 2)
    anc_e = anc_vec[:, :, :, None, :]                              # (B, N, N, 1, 2)
    dot = jnp.sum(ref_e * anc_e, axis=-1)                          # (B, N, N, k)
    mag_ref = jnp.linalg.norm(ref_e, axis=-1)
    mag_anc = jnp.linalg.norm(anc_e, axis=-1)
    angles = jnp.arctan2(dot, mag_ref * mag_anc)
    return angles * angular_factor


def sinusoidal_embedding(x, d_model):
    # GeoTransformer-style sinusoidal embedding (interleaved sin/cos).
    div_term = jnp.exp(jnp.arange(0, d_model, 2, dtype=jnp.float32)
                       * (-math.log(10000.0) / d_model))
    omegas = x[..., None] * div_term
    emb = jnp.stack([jnp.sin(omegas), jnp.cos(omegas)], axis=-1)
    return emb.reshape(*x.shape, d_model)


# ----------------------------------------------------------------------------
# Full SelfAttention forward
# ----------------------------------------------------------------------------
def self_attention_forward(coords, features, params, k=8, num_heads=4):
    B, C, N = features.shape
    kk = min(k, N - 1)
    coords_t = jnp.transpose(coords, (0, 2, 1)).astype(jnp.float32)  # (B, N, 2)

    # TODO(synk): top-k kNN neighbor selection has no clean Pallas equivalent;
    # it stays in plain JAX (XLA sort / top_k).
    dist = square_distance_jax(coords_t, coords_t)
    _, idx_full = jax.lax.top_k(-dist, kk + 1)
    idx = idx_full[:, :, 1:]                                         # (B, N, kk)

    # edge-conv block 1 (fused conv1 + InstanceNorm + leaky_relu + max_k)
    x1_cat = graph_feature_kmajor(features, idx)                     # (B, 2C, kk, N)
    x1 = edgeconv_fused_pallas(x1_cat.reshape(B, 2 * C, kk * N),
                               params["conv1_w"], kk)                # (B, C, N)

    # relative-positional path: angular -> sinusoidal -> mean_k -> folded linear
    # (mean over k commutes with the affine proj1; proj1 and proj_p are folded
    #  into a single matmul: W = Wp @ W1, b = b1 @ Wp^T + bp)
    ang = angular_embedding(coords_t, idx, 0.5)                      # (B, N, N, kk)
    emb = sinusoidal_embedding(ang, C)                               # (B, N, N, kk, C)
    a1m = jnp.mean(emb, axis=3)                                      # (B, N, N, C)
    w_fold = params["projp_w"] @ params["proj1_w"]
    b_fold = params["proj1_b"] @ params["projp_w"].T + params["projp_b"]
    p = linear_rows_pallas(a1m.reshape(B * N * N, C), w_fold, b_fold)
    p = jnp.transpose(p.reshape(B, N, N, C), (0, 3, 1, 2))           # (B, C, N, N)

    # edge-conv block 2
    x2_cat = graph_feature_kmajor(x1, idx)                           # (B, 2C, kk, N)
    x2 = edgeconv_fused_pallas(x2_cat.reshape(B, 2 * C, kk * N),
                               params["conv2_w"], kk)                # (B, 2C, N)

    # conv3 block (num_k = 1: InstanceNorm over N, leaky_relu, no max)
    x3cat = jnp.concatenate([features, x1, x2], axis=1)              # (B, 4C, N)
    x3 = edgeconv_fused_pallas(x3cat, params["conv3_w"], 1)          # (B, C, N)

    # fused QKV + MHA (rel-pos) + proj2 + residual + LayerNorm -> (B, C, N)
    return attn_block_pallas(x3, p, params, num_heads)


# ----------------------------------------------------------------------------
# Deterministic parameter init (shapes follow the nn.Module __init__)
# ----------------------------------------------------------------------------
def init_params(key, feature_dim):
    C = feature_dim
    ks = jax.random.split(key, 16)

    def w(kk, shape, scale=0.1):
        return scale * jax.random.normal(kk, shape, dtype=jnp.float32)

    return {
        "conv1_w": w(ks[0], (C, 2 * C)),       # Conv2d(2C, C, 1, bias=False)
        "conv2_w": w(ks[1], (2 * C, 2 * C)),   # Conv2d(2C, 2C, 1, bias=False)
        "conv3_w": w(ks[2], (C, 4 * C)),       # Conv2d(4C, C, 1, bias=False)
        "proj1_w": w(ks[3], (C, C)), "proj1_b": w(ks[4], (1, C)),
        "wq": w(ks[5], (C, C)), "bq": w(ks[6], (1, C)),
        "wk": w(ks[7], (C, C)), "bk": w(ks[8], (1, C)),
        "wv": w(ks[9], (C, C)), "bv": w(ks[10], (1, C)),
        "projp_w": w(ks[11], (C, C)), "projp_b": w(ks[12], (1, C)),
        "w2": w(ks[13], (C, C)), "b2": w(ks[14], (1, C)),
        "ln_g": jnp.ones((1, C), jnp.float32),
        "ln_b": jnp.zeros((1, C), jnp.float32),
    }


if __name__ == "__main__":
    B, C, N, K = 2, 32, 16, 8
    key = jax.random.PRNGKey(0)
    kc, kf, kp = jax.random.split(key, 3)
    coords = jax.random.normal(kc, (B, 2, N), dtype=jnp.float32)
    features = jax.random.normal(kf, (B, C, N), dtype=jnp.float32)
    params = init_params(kp, C)

    out = self_attention_forward(coords, features, params, k=K, num_heads=4)
    out = jax.block_until_ready(out)
    assert out.shape == (B, C, N)
    assert bool(jnp.all(jnp.isfinite(out)))
    print("KERNEL_OK")
</pallas_src>

<mosaic_0001>
module attributes {stable_mosaic.version = 11 : i64} {
  func.func @_edgeconv_kernel(%arg0: i32, %arg1: memref<1x64x128xf32, #tpu.memory_space<vmem>>, %arg2: memref<32x64xf32, #tpu.memory_space<vmem>>, %arg3: memref<1x32x16xf32, #tpu.memory_space<vmem>>) attributes {dimension_semantics = [#tpu.dimension_semantics<parallel>], iteration_bounds = array<i64: 2>, scalar_prefetch = 0 : i64, scratch_operands = 0 : i64, tpu.core_type = #tpu.core_type<tc>, window_params = [{transform_indices = @transform_0, window_bounds = array<i64: 1, 64, 128>}, {pipeline_mode = #tpu.pipeline_mode<synchronous>, transform_indices = @transform_1, window_bounds = array<i64: 32, 64>}, {transform_indices = @transform_2, window_bounds = array<i64: 1, 32, 16>}]} {
    %c0 = arith.constant 0 : index
    %c0_0 = arith.constant 0 : index
    %c0_1 = arith.constant 0 : index
    %0 = vector.load %arg1[%c0, %c0_0, %c0_1] : memref<1x64x128xf32, #tpu.memory_space<vmem>>, vector<1x64x128xf32>
    %1 = vector.shape_cast %0 : vector<1x64x128xf32> to vector<64x128xf32>
    %c0_2 = arith.constant 0 : index
    %c0_3 = arith.constant 0 : index
    %2 = vector.load %arg2[%c0_2, %c0_3] : memref<32x64xf32, #tpu.memory_space<vmem>>, vector<32x64xf32>
    %3 = arith.truncf %2 : vector<32x64xf32> to vector<32x64xbf16>
    %4 = arith.truncf %1 : vector<64x128xf32> to vector<64x128xbf16>
    %cst = arith.constant dense<0.000000e+00> : vector<32x128xf32>
    %5 = tpu.matmul %3, %4, %cst {dimension_numbers = #tpu.dot_dimension_numbers<[1], [0], [0], [1], [0, 0, 1, 1], [], []>} : vector<32x64xbf16>, vector<64x128xbf16>, vector<32x128xf32> -> vector<32x128xf32>
    %cst_4 = arith.constant dense<0.000000e+00> : vector<32xf32>
    %6 = vector.multi_reduction <add>, %5, %cst_4 [1] : vector<32x128xf32> to vector<32xf32>
    %7 = vector.shape_cast %6 : vector<32xf32> to vector<32x1xf32>
    %cst_5 = arith.constant 1.280000e+02 : f32
    %8 = vector.broadcast %cst_5 : f32 to vector<32x1xf32>
    %9 = arith.divf %7, %8 : vector<32x1xf32>
    %10 = vector.broadcast %9 : vector<32x1xf32> to vector<32x128xf32>
    %11 = arith.subf %5, %10 : vector<32x128xf32>
    %12 = arith.mulf %11, %11 : vector<32x128xf32>
    %cst_6 = arith.constant dense<0.000000e+00> : vector<32xf32>
    %13 = vector.multi_reduction <add>, %12, %cst_6 [1] : vector<32x128xf32> to vector<32xf32>
    %14 = vector.shape_cast %13 : vector<32xf32> to vector<32x1xf32>
    %cst_7 = arith.constant 1.280000e+02 : f32
    %15 = vector.broadcast %cst_7 : f32 to vector<32x1xf32>
    %16 = arith.divf %14, %15 : vector<32x1xf32>
    %cst_8 = arith.constant 9.99999974E-6 : f32
    %17 = vector.broadcast %cst_8 : f32 to vector<32x1xf32>
    %18 = arith.addf %16, %17 : vector<32x1xf32>
    %19 = math.rsqrt %18 : vector<32x1xf32>
    %20 = vector.broadcast %19 : vector<32x1xf32> to vector<32x128xf32>
    %21 = arith.mulf %11, %20 : vector<32x128xf32>
    %cst_9 = arith.constant 0.000000e+00 : f32
    %22 = vector.broadcast %cst_9 : f32 to vector<32x128xf32>
    %23 = arith.cmpf oge, %21, %22 : vector<32x128xf32>
    %cst_10 = arith.constant 2.000000e-01 : f32
    %24 = vector.broadcast %cst_10 : f32 to vector<32x128xf32>
    %25 = arith.mulf %24, %21 : vector<32x128xf32>
    %26 = arith.select %23, %21, %25 : vector<32x128xi1>, vector<32x128xf32>
    %27 = vector.extract_strided_slice %26 {offsets = [0, 0], sizes = [32, 16], strides = [1, 1]} : vector<32x128xf32> to vector<32x16xf32>
    %28 = vector.extract_strided_slice %26 {offsets = [0, 16], sizes = [32, 16], strides = [1, 1]} : vector<32x128xf32> to vector<32x16xf32>
    %29 = arith.maximumf %27, %28 : vector<32x16xf32>
    %30 = vector.extract_strided_slice %26 {offsets = [0, 32], sizes = [32, 16], strides = [1, 1]} : vector<32x128xf32> to vector<32x16xf32>
    %31 = arith.maximumf %29, %30 : vector<32x16xf32>
    %32 = vector.extract_strided_slice %26 {offsets = [0, 48], sizes = [32, 16], strides = [1, 1]} : vector<32x128xf32> to vector<32x16xf32>
    %33 = arith.maximumf %31, %32 : vector<32x16xf32>
    %34 = vector.extract_strided_slice %26 {offsets = [0, 64], sizes = [32, 16], strides = [1, 1]} : vector<32x128xf32> to vector<32x16xf32>
    %35 = arith.maximumf %33, %34 : vector<32x16xf32>
    %36 = vector.extract_strided_slice %26 {offsets = [0, 80], sizes = [32, 16], strides = [1, 1]} : vector<32x128xf32> to vector<32x16xf32>
    %37 = arith.maximumf %35, %36 : vector<32x16xf32>
    %38 = vector.extract_strided_slice %26 {offsets = [0, 96], sizes = [32, 16], strides = [1, 1]} : vector<32x128xf32> to vector<32x16xf32>
    %39 = arith.maximumf %37, %38 : vector<32x16xf32>
    %40 = vector.extract_strided_slice %26 {offsets = [0, 112], sizes = [32, 16], strides = [1, 1]} : vector<32x128xf32> to vector<32x16xf32>
    %41 = arith.maximumf %39, %40 : vector<32x16xf32>
    %c0_11 = arith.constant 0 : index
    %c0_12 = arith.constant 0 : index
    %c0_13 = arith.constant 0 : index
    %42 = vector.load %arg3[%c0_11, %c0_12, %c0_13] : memref<1x32x16xf32, #tpu.memory_space<vmem>>, vector<1x32x16xf32>
    %43 = vector.shape_cast %42 : vector<1x32x16xf32> to vector<32x16xf32>
    %44 = vector.shape_cast %41 : vector<32x16xf32> to vector<1x32x16xf32>
    tpu.vector_store %arg3[%c0_11, %c0_12, %c0_13], %44 {strides = array<i32>} : memref<1x32x16xf32, #tpu.memory_space<vmem>>, vector<1x32x16xf32>,
    return
  }
  func.func @transform_0(%arg0: i32) -> (i32, i32, i32) {
    %c0_i32 = arith.constant 0 : i32
    %c0_i32_0 = arith.constant 0 : i32
    %c0_i32_1 = arith.constant 0 : i32
    return %arg0, %c0_i32, %c0_i32_0 : i32, i32, i32
  }
  func.func @transform_1(%arg0: i32) -> (i32, i32) {
    %c0_i32 = arith.constant 0 : i32
    %c0_i32_0 = arith.constant 0 : i32
    %c0_i32_1 = arith.constant 0 : i32
    return %c0_i32, %c0_i32_0 : i32, i32
  }
  func.func @transform_2(%arg0: i32) -> (i32, i32, i32) {
    %c0_i32 = arith.constant 0 : i32
    %c0_i32_0 = arith.constant 0 : i32
    %c0_i32_1 = arith.constant 0 : i32
    return %arg0, %c0_i32, %c0_i32_0 : i32, i32, i32
  }
}

</mosaic_0001>

<llo_original>
// kernel: tpu_custom_call.1
$region0: #{tpu_custom_call.1}
  #allocation0 [shape = 'u32[]', space=smem, size = 0x4, offset = 0x4, fixed_abs, tag = 'smem constant byte address 0x4 - core index']
  #allocation1 [shape = 'u32[144,128]{1,0:T(1,128)}', space=vmem, size = 0x12000, scoped, tag = 'internal scratch']
  %s0 = inlined_call_operand.hbm [shape: f32[2,64,128], index: 0, kind: input, shape index: {}]
  %s1 = inlined_call_operand.hbm [shape: f32[32,64], index: 1, kind: input, shape index: {}]
  %s2 = inlined_call_operand.vmem [shape: f32[2,32,16], index: 2, kind: output, shape index: {}]
  %s3 = sld [smem:[#allocation0]]
  $region49: #{tpu_custom_call.1} parent=0
    _
  %s5 = ssub.s32 1, %s3
  %s6 = scalar_select 0, %s5, %s3
  $region1: #{tpu_custom_call.1} parent=0
    #allocation2 [shape = 'u8[65536]{0}', space=vmem, size = 0x10000, scoped, tag = 'input window, operand 0']
    #allocation3 [shape = 's32[2]{0}', space=sflag, size = 0x8, scoped, tag = 'scoped memory for tpu_custom_call.1']
    #allocation4 [shape = 'u8[16384]{0}', space=vmem, size = 0x4000, scoped, tag = 'input window, operand 1, single buffered']
    #allocation5 [shape = 's32[1]{0}', space=sflag, size = 0x4, scoped, tag = 'scoped memory for tpu_custom_call.1']
    %7 = vsyncpa [#allocation3], 0
    %s8 = scalar_lea.sflag [#allocation3], 1
    %9 = vsyncpa %s8, 0
    %10 = vsyncpa [#allocation5], 0
    loop: start=0, step=1, limit=4
    $region2: #{tpu_custom_call.1} parent=1 // loop_pre_header
      _
    $region3: #{tpu_custom_call.1} parent=1 // loop_header
      %s12 = sphi 0, %s16
      %p13 = scmp.ge.s32.totalorder %s12, 4
      %s22 = sphi 0, %s24
      %s25 = sphi 0, %s22
      %s26 = sphi 0, %s25
      %s42 = sphi 0, %s26
      %s46 = sphi 0, %s46
      %s48 = sphi 0, %s46
      %s49 = sphi 0, %s48
      %s63 = sphi 0, %s49
      %s69 = sphi 0, %s71
      %s72 = sphi 0, %s69
      %s73 = sphi 0, %s72
      %s89 = sphi 0, %s73
    $region4: #{tpu_custom_call.1} parent=1 // loop_header_branch
      %15 = sbr.rel (%p13) target = $region8
    $region5: #{tpu_custom_call.1} parent=1 // loop_body
      %s17 = ssub.s32 %s12, 1
      %s18 = ssub.s32 %s12, 2
      %s19 = sadd.s32 %s12, 1
      %s20 = ssub.s32 %s12, %s19
      %p21 = scmp.eq.s32.totalorder %s20, 0
      %s23 = sadd.s32 %s22, 1
      %s24 = scalar_select %p21, %s22, %s23
      %p27 = pneg %p21
      %p28 = scmp.eq.s32.totalorder %s12, 1
      %p29 = por %p27, %p28
      %p30 = scmp.ne.s32.totalorder %s22, %s25
      %p31 = scmp.eq.s32.totalorder %s12, 0
      %p32 = por %p30, %p31
      %p33 = scmp.ne.s32.totalorder %s22, %s25
      %p34 = scmp.eq.s32.totalorder %s17, 1
      %p35 = por %p33, %p34
      %p36 = scmp.ne.s32.totalorder %s25, %s26
      %p37 = scmp.eq.s32.totalorder %s17, 0
      %p38 = por %p36, %p37
      %p39 = scmp.ne.s32.totalorder %s25, %s26
      %p40 = scmp.eq.s32.totalorder %s18, 1
      %p41 = por %p39, %p40
      %p43 = scmp.ne.s32.totalorder %s26, %s42
      %p44 = scmp.eq.s32.totalorder %s18, 0
      %p45 = por %p43, %p44
      %s47 = sadd.s32 %s46, 1
      %p50 = scmp.eq.s32.totalorder %s12, 1
      %p51 = scmp.ne.s32.totalorder %s46, %s48
      %p52 = scmp.eq.s32.totalorder %s12, 0
      %p53 = por %p51, %p52
      %p54 = scmp.ne.s32.totalorder %s46, %s48
      %p55 = scmp.eq.s32.totalorder %s17, 1
      %p56 = por %p54, %p55
      %p57 = scmp.ne.s32.totalorder %s48, %s49
      %p58 = scmp.eq.s32.totalorder %s17, 0
      %p59 = por %p57, %p58
      %p60 = scmp.ne.s32.totalorder %s48, %s49
      %p61 = scmp.eq.s32.totalorder %s18, 1
      %p62 = por %p60, %p61
      %p64 = scmp.ne.s32.totalorder %s49, %s63
      %p65 = scmp.eq.s32.totalorder %s18, 0
      %p66 = por %p64, %p65
      %s67 = ssub.s32 %s12, %s19
      %p68 = scmp.eq.s32.totalorder %s67, 0
      %s70 = sadd.s32 %s69, 1
      %s71 = scalar_select %p68, %s69, %s70
      %p74 = pneg %p68
      %p75 = scmp.eq.s32.totalorder %s12, 1
      %p76 = por %p74, %p75
      %p77 = scmp.ne.s32.totalorder %s69, %s72
      %p78 = scmp.eq.s32.totalorder %s12, 0
      %p79 = por %p77, %p78
      %p80 = scmp.ne.s32.totalorder %s69, %s72
      %p81 = scmp.eq.s32.totalorder %s17, 1
      %p82 = por %p80, %p81
      %p83 = scmp.ne.s32.totalorder %s72, %s73
      %p84 = scmp.eq.s32.totalorder %s17, 0
      %p85 = por %p83, %p84
      %p86 = scmp.ne.s32.totalorder %s72, %s73
      %p87 = scmp.eq.s32.totalorder %s18, 1
      %p88 = por %p86, %p87
      %p90 = scmp.ne.s32.totalorder %s73, %s89
      %p91 = scmp.eq.s32.totalorder %s18, 0
      %p92 = por %p90, %p91
      %p93 = scmp.le.s32.totalorder 1, %s12
      %p94 = scmp.lt.s32.totalorder %s12, 3
      %p95 = pnand %p93, %p94
      %p96 = pneg %p95
      // Predicated region
      $region9: #{tpu_custom_call.1} parent=5 // pred_check
        _
      $region10: #{tpu_custom_call.1} parent=5 // pred_check_branch
        %98 = sbr.rel (%p95) target = $region12
      $region11: #{tpu_custom_call.1} parent=5 // pred_region
        %s99 = ssub.s32 %s12, 1
        // Predicated region
        $region13: #{tpu_custom_call.1} parent=11 // pred_check
          %p100 = pneg %p59
        $region14: #{tpu_custom_call.1} parent=11 // pred_check_branch
          %102 = sbr.rel (%p100) target = $region16
        $region15: #{tpu_custom_call.1} parent=11 // pred_region
          %s104 = ssub.s32 512, 512
          %105 = vsyncadd [#allocation5], %s104
          %s106 = sshll.u32 [#allocation4], 4
          %s107 = int_to_ptr.vmem [resolvable:$true] %s106
          %112 = dma.hbm_to_vmem [thread:$0]  %s1, 512, %s107, [#allocation5], 128, 128, 8
        $region16: #{tpu_custom_call.1} parent=11 // pred_fallthru
          _
      $region12: #{tpu_custom_call.1} parent=5 // pred_fallthru
        _
      %p113 = scmp.lt.s32.totalorder %s12, 2
      // Predicated region
      $region17: #{tpu_custom_call.1} parent=5 // pred_check
        %p114 = pneg %p113
      $region18: #{tpu_custom_call.1} parent=5 // pred_check_branch
        %116 = sbr.rel (%p114) target = $region20
      $region19: #{tpu_custom_call.1} parent=5 // pred_region
        // Predicated region
        $region21: #{tpu_custom_call.1} parent=19 // pred_check
          %p117 = pneg %p32
        $region22: #{tpu_custom_call.1} parent=19 // pred_check_branch
          %119 = sbr.rel (%p117) target = $region24
        $region23: #{tpu_custom_call.1} parent=19 // pred_region
          %s120 = sand.u32 %s22, 1
          %s121 = scalar_lea.sflag [#allocation3], %s120
          %s122 = sand.u32 %s22, 1
          %s123 = smul.addr %s122, 64
          %s124 = scalar_lea.vmem [#allocation2], %s123
          %s126 = ssub.s32 1024, 1024
          %127 = vsyncadd %s121, %s126
          %s128 = smul.addr %s12, 8
          %s129 = smul.addr %s128, 128
          %s130 = scalar_lea.hbm %s0, %s129
          %s131 = sshll.u32 %s124, 4
          %s132 = int_to_ptr.vmem [resolvable:$true] %s131
          %137 = dma.hbm_to_vmem [thread:$0]  %s130, 1024, %s132, %s121, 128, 128, 8
        $region24: #{tpu_custom_call.1} parent=19 // pred_fallthru
          _
      $region20: #{tpu_custom_call.1} parent=5 // pred_fallthru
        _
      %p138 = scmp.le.s32.totalorder 1, %s12
      %p139 = scmp.lt.s32.totalorder %s12, 3
      %p140 = pnand %p138, %p139
      %p141 = pneg %p140
      // Predicated region
      $region25: #{tpu_custom_call.1} parent=5 // pred_check
        _
      $region26: #{tpu_custom_call.1} parent=5 // pred_check_branch
        %143 = sbr.rel (%p140) target = $region28
      $region27: #{tpu_custom_call.1} parent=5 // pred_region
        %s144 = ssub.s32 %s12, 1
        %s145 = sand.u32 %s25, 1
        %s146 = scalar_lea.sflag [#allocation3], %s145
        %s147 = sand.u32 %s25, 1
        %s148 = smul.addr %s147, 64
        %s149 = scalar_lea.vmem [#allocation2], %s148
        // Predicated region
        $region29: #{tpu_custom_call.1} parent=27 // pred_check
          %p150 = pneg %p38
        $region30: #{tpu_custom_call.1} parent=27 // pred_check_branch
          %152 = sbr.rel (%p150) target = $region32
        $region31: #{tpu_custom_call.1} parent=27 // pred_region
          %153 = dma.done %s146, 1024
        $region32: #{tpu_custom_call.1} parent=27 // pred_fallthru
          _
        // Predicated region
        $region33: #{tpu_custom_call.1} parent=27 // pred_check
          %p154 = pneg %p59
        $region34: #{tpu_custom_call.1} parent=27 // pred_check_branch
          %156 = sbr.rel (%p154) target = $region36
        $region35: #{tpu_custom_call.1} parent=27 // pred_region
          %157 = dma.done [#allocation5], 512
        $region36: #{tpu_custom_call.1} parent=27 // pred_fallthru
          _
        %s158 = sand.u32 %s25, 1
        %s159 = scalar_lea.sflag [#allocation3], %s158
        %s160 = sand.u32 %s25, 1
        %s161 = smul.addr %s160, 64
        %s162 = scalar_lea.vmem [#allocation2], %s161
        %p163 = pneg %p38
        %p164 = pneg %p35
        %p165 = pneg %p59
        %p166 = pneg %p56
        %p167 = pneg %p85
        %p168 = pneg %p82
        %p169 = scmp.lt.s32.totalorder %s17, 1
        %s170 = scalar_select %p169, %s17, 1
        %s171 = smul.addr %s170, 4
        %s172 = smul.addr %s171, 8
        %s173 = scalar_lea.vmem %s2, %s172
        %p174 = scmp.lt.s32.totalorder %s17, 1
        %s175 = scalar_select %p174, %s17, 1
        %s176 = smul.addr %s175, 4
        %s177 = smul.addr %s176, 8
        %s178 = scalar_lea.vmem %s2, %s177
        %v180 = vld [vmem:[%s149] sm:$0xff]
        %v181 = vld [vmem:[%s149 + $0x8] sm:$0xff]
        %v182 = vld [vmem:[%s149 + $0x10] sm:$0xff]
        %v183 = vld [vmem:[%s149 + $0x18] sm:$0xff]
        %v184 = vld [vmem:[%s149 + $0x20] sm:$0xff]
        %v185 = vld [vmem:[%s149 + $0x28] sm:$0xff]
        %v186 = vld [vmem:[%s149 + $0x30] sm:$0xff]
        %v187 = vld [vmem:[%s149 + $0x38] sm:$0xff]
        %v188 = vld [vmem:[#allocation4] sm:$0xff]
        %v189 = vld [vmem:[#allocation4 + $0x8] sm:$0xff]
        %v190 = vld [vmem:[#allocation4 + $0x10] sm:$0xff]
        %v191 = vld [vmem:[#allocation4 + $0x18] sm:$0xff]
        %v192 = vpack.c.bf16 %v189, %v188
        %v193 = vpack.c.bf16 %v191, %v190
        %v194 = vpack.c.bf16 %v181, %v180
        %v195 = vpack.c.bf16 %v183, %v182
        %v196 = vpack.c.bf16 %v185, %v184
        %v197 = vpack.c.bf16 %v187, %v186
        %vm198 = vcmask 523264
        %v200 = vsel %vm198, %v192, 0
        %v203 = vsel %vm198, %v193, 0
        %205 = vmatprep.subr.bf16.mxu0 0
        %206 = vmatpush1.bf16.msra.mxu0 %v194
        %207 = vmatprep.subr.bf16.mxu0 0
        %208 = vmatpush1.bf16.msra.mxu0 %v195
        %209 = vmatprep.subr.bf16.mxu0 0
        %210 = vmatpush1.bf16.msra.mxu0 %v196
        %211 = vmatprep.subr.bf16.mxu0 0
        %212 = vmatpush1.bf16.msra.mxu0 %v197
        %213 = vmatprep.subr.bf16.mxu0 0
        %214 = vmatpush1.bf16.msra.mxu0 0
        %215 = vmatprep.subr.bf16.mxu0 0
        %216 = vmatpush1.bf16.msra.mxu0 0
        %217 = vmatprep.subr.bf16.mxu0 0
        %218 = vmatpush1.bf16.msra.mxu0 0
        %219 = vmatprep.subr.bf16.mxu0 0
        %220 = vmatpush1.bf16.msra.mxu0 0
        %221 = vmatprep.subr.bf16.mxu0 0
        %222 = vmatpush1.bf16.msra.mxu0 0
        %223 = vmatprep.subr.bf16.mxu0 0
        %224 = vmatpush1.bf16.msra.mxu0 0
        %225 = vmatprep.subr.bf16.mxu0 0
        %226 = vmatpush1.bf16.msra.mxu0 0
        %227 = vmatprep.subr.bf16.mxu0 0
        %228 = vmatpush1.bf16.msra.mxu0 0
        %229 = vmatprep.subr.bf16.mxu0 0
        %230 = vmatpush1.bf16.msra.mxu0 0
        %231 = vmatprep.subr.bf16.mxu0 0
        %232 = vmatpush1.bf16.msra.mxu0 0
        %233 = vmatprep.subr.bf16.mxu0 0
        %234 = vmatpush1.bf16.msra.mxu0 0
        %235 = vmatprep.subr.bf16.mxu0 0
        %236 = vmatpush1.bf16.msra.mxu0 0
        %237 = vmatprep.mubr.bf16.mxu0 0
        %238 = vmatmul.mubr.bf16.gmra.mrb[0].mxu0 %v200
        %v239 = vpop.f32.mrb[0].mxu0
        %v240 = vadd.f32 0.0, %v239
        %v241 = vpop.f32.mrb[0].mxu0
        %v242 = vpop.f32.mrb[0].mxu0
        %v243 = vadd.f32 0.0, %v242
        %v244 = vpop.f32.mrb[0].mxu0
        %245 = vmatprep.mubr.bf16.mxu0 0
        %246 = vmatmul.mubr.bf16.gmra.mrb[0].mxu0 %v203
        %v247 = vpop.f32.mrb[0].mxu0
        %v248 = vadd.f32 0.0, %v247
        %v249 = vpop.f32.mrb[0].mxu0
        %v250 = vpop.f32.mrb[0].mxu0
        %v251 = vadd.f32 0.0, %v250
        %v252 = vpop.f32.mrb[0].mxu0
        %253 = vdwg.mxu0
        %254 = vadd.xlane.f32.xlu0 %v240
        %v255 = vpop.xlane.xlu0 %254
        %256 = vadd.xlane.f32.xlu0 %v243
        %v257 = vpop.xlane.xlu0 %256
        %258 = vadd.xlane.f32.xlu0 %v248
        %v259 = vpop.xlane.xlu0 %258
        %260 = vadd.xlane.f32.xlu0 %v251
        %v261 = vpop.xlane.xlu0 %260
        %v262 = vrcp.pop 128.0
        %v263 = vmul.f32 %v255, %v262
        %v264 = vmul.f32 %v257, %v262
        %v265 = vmul.f32 %v259, %v262
        %v266 = vmul.f32 %v261, %v262
        %v267 = vsub.f32 %v240, %v263
        %v268 = vsub.f32 %v243, %v264
        %v269 = vsub.f32 %v248, %v265
        %v270 = vsub.f32 %v251, %v266
        %v271 = vmul.f32 %v267, %v267
        %v272 = vmul.f32 %v268, %v268
        %v273 = vmul.f32 %v269, %v269
        %v274 = vmul.f32 %v270, %v270
        %275 = vadd.xlane.f32.xlu0 %v271
        %v276 = vpop.xlane.xlu0 %275
        %277 = vadd.xlane.f32.xlu0 %v272
        %v278 = vpop.xlane.xlu0 %277
        %279 = vadd.xlane.f32.xlu0 %v273
        %v280 = vpop.xlane.xlu0 %279
        %281 = vadd.xlane.f32.xlu0 %v274
        %v282 = vpop.xlane.xlu0 %281
        %v283 = vmul.f32 %v276, %v262
        %v284 = vmul.f32 %v278, %v262
        %v285 = vmul.f32 %v280, %v262
        %v286 = vmul.f32 %v282, %v262
        %v287 = vadd.f32 %v283, 1e-05
        %v288 = vadd.f32 %v284, 1e-05
        %v289 = vadd.f32 %v285, 1e-05
        %v290 = vadd.f32 %v286, 1e-05
        %v291 = vrsqrt.pop %v287
        %v292 = vrsqrt.pop %v288
        %v293 = vrsqrt.pop %v289
        %v294 = vrsqrt.pop %v290
        %v295 = vmul.f32 %v267, %v291
        %v296 = vmul.f32 %v268, %v292
        %v297 = vmul.f32 %v269, %v293
        %v298 = vmul.f32 %v270, %v294
        %vm299 = vcmp.ge.f32.partialorder %v295, 0.0
        %vm300 = vcmp.ge.f32.partialorder %v296, 0.0
        %vm301 = vcmp.ge.f32.partialorder %v297, 0.0
        %vm302 = vcmp.ge.f32.partialorder %v298, 0.0
        %v303 = vmul.f32 %v295, 0.2
        %v304 = vmul.f32 %v296, 0.2
        %v305 = vmul.f32 %v297, 0.2
        %v306 = vmul.f32 %v298, 0.2
        %v307 = vsel %vm299, %v295, %v303
        %v308 = vsel %vm300, %v296, %v304
        %v309 = vsel %vm301, %v297, %v305
        %v310 = vsel %vm302, %v298, %v306
        %315 = vrot.lane.b32.xlu0 %v307, 112
        %v316 = vpop.permute.xlu0 %315
        %317 = vrot.lane.b32.xlu0 %v308, 112
        %v318 = vpop.permute.xlu0 %317
        %319 = vrot.lane.b32.xlu0 %v309, 112
        %v320 = vpop.permute.xlu0 %319
        %321 = vrot.lane.b32.xlu0 %v310, 112
        %v322 = vpop.permute.xlu0 %321
        %v327 = vmax.f32 %v307, %v316
        %v328 = vmax.f32 %v308, %v318
        %v329 = vmax.f32 %v309, %v320
        %v330 = vmax.f32 %v310, %v322
        %331 = vrot.lane.b32.xlu0 %v307, 96
        %v332 = vpop.permute.xlu0 %331
        %333 = vrot.lane.b32.xlu0 %v308, 96
        %v334 = vpop.permute.xlu0 %333
        %335 = vrot.lane.b32.xlu0 %v309, 96
        %v336 = vpop.permute.xlu0 %335
        %337 = vrot.lane.b32.xlu0 %v310, 96
        %v338 = vpop.permute.xlu0 %337
        %v343 = vmax.f32 %v327, %v332
        %v344 = vmax.f32 %v328, %v334
        %v345 = vmax.f32 %v329, %v336
        %v346 = vmax.f32 %v330, %v338
        %347 = vrot.lane.b32.xlu0 %v307, 80
        %v348 = vpop.permute.xlu0 %347
        %349 = vrot.lane.b32.xlu0 %v308, 80
        %v350 = vpop.permute.xlu0 %349
        %351 = vrot.lane.b32.xlu0 %v309, 80
        %v352 = vpop.permute.xlu0 %351
        %353 = vrot.lane.b32.xlu0 %v310, 80
        %v354 = vpop.permute.xlu0 %353
        %v359 = vmax.f32 %v343, %v348
        %v360 = vmax.f32 %v344, %v350
        %v361 = vmax.f32 %v345, %v352
        %v362 = vmax.f32 %v346, %v354
        %363 = vrot.lane.b32.xlu0 %v307, 64
        %v364 = vpop.permute.xlu0 %363
        %365 = vrot.lane.b32.xlu0 %v308, 64
        %v366 = vpop.permute.xlu0 %365
        %367 = vrot.lane.b32.xlu0 %v309, 64
        %v368 = vpop.permute.xlu0 %367
        %369 = vrot.lane.b32.xlu0 %v310, 64
        %v370 = vpop.permute.xlu0 %369
        %v375 = vmax.f32 %v359, %v364
        %v376 = vmax.f32 %v360, %v366
        %v377 = vmax.f32 %v361, %v368
        %v378 = vmax.f32 %v362, %v370
        %379 = vrot.lane.b32.xlu0 %v307, 48
        %v380 = vpop.permute.xlu0 %379
        %381 = vrot.lane.b32.xlu0 %v308, 48
        %v382 = vpop.permute.xlu0 %381
        %383 = vrot.lane.b32.xlu0 %v309, 48
        %v384 = vpop.permute.xlu0 %383
        %385 = vrot.lane.b32.xlu0 %v310, 48
        %v386 = vpop.permute.xlu0 %385
        %v391 = vmax.f32 %v375, %v380
        %v392 = vmax.f32 %v376, %v382
        %v393 = vmax.f32 %v377, %v384
        %v394 = vmax.f32 %v378, %v386
        %395 = vrot.lane.b32.xlu0 %v307, 32
        %v396 = vpop.permute.xlu0 %395
        %397 = vrot.lane.b32.xlu0 %v308, 32
        %v398 = vpop.permute.xlu0 %397
        %399 = vrot.lane.b32.xlu0 %v309, 32
        %v400 = vpop.permute.xlu0 %399
        %401 = vrot.lane.b32.xlu0 %v310, 32
        %v402 = vpop.permute.xlu0 %401
        %v407 = vmax.f32 %v391, %v396
        %v408 = vmax.f32 %v392, %v398
        %v409 = vmax.f32 %v393, %v400
        %v410 = vmax.f32 %v394, %v402
        %411 = vrot.lane.b32.xlu0 %v307, 16
        %v412 = vpop.permute.xlu0 %411
        %413 = vrot.lane.b32.xlu0 %v308, 16
        %v414 = vpop.permute.xlu0 %413
        %415 = vrot.lane.b32.xlu0 %v309, 16
        %v416 = vpop.permute.xlu0 %415
        %417 = vrot.lane.b32.xlu0 %v310, 16
        %v418 = vpop.permute.xlu0 %417
        %v423 = vmax.f32 %v407, %v412
        %v424 = vmax.f32 %v408, %v414
        %v425 = vmax.f32 %v409, %v416
        %v426 = vmax.f32 %v410, %v418
        %vm427 = vcmask 130048
        %428 = vst.msk [vmem:[%s178] sm:$0xff] %vm427, %v423
        %429 = vst.msk [vmem:[%s178 + $0x8] sm:$0xff] %vm427, %v424
        %430 = vst.msk [vmem:[%s178 + $0x10] sm:$0xff] %vm427, %v425
        %431 = vst.msk [vmem:[%s178 + $0x18] sm:$0xff] %vm427, %v426
        %p432 = scmp.lt.s32.totalorder %s17, 1
        %s433 = scalar_select %p432, %s17, 1
        %s434 = smul.addr %s433, 4
        %s435 = smul.addr %s434, 8
        %s436 = scalar_lea.vmem %s2, %s435
        // Predicated region
        $region37: #{tpu_custom_call.1} parent=27 // pred_check
          %p437 = pneg %p82
        $region38: #{tpu_custom_call.1} parent=27 // pred_check_branch
          %439 = sbr.rel (%p437) target = $region40
        $region39: #{tpu_custom_call.1} parent=27 // pred_region
          _
        $region40: #{tpu_custom_call.1} parent=27 // pred_fallthru
          _
      $region28: #{tpu_custom_call.1} parent=5 // pred_fallthru
        _
      %p440 = scmp.le.s32.totalorder 2, %s12
      // Predicated region
      $region41: #{tpu_custom_call.1} parent=5 // pred_check
        %p441 = pneg %p440
      $region42: #{tpu_custom_call.1} parent=5 // pred_check_branch
        %443 = sbr.rel (%p441) target = $region44
      $region43: #{tpu_custom_call.1} parent=5 // pred_region
        %s444 = ssub.s32 %s12, 2
        // Predicated region
        $region45: #{tpu_custom_call.1} parent=43 // pred_check
          %p445 = pneg %p88
        $region46: #{tpu_custom_call.1} parent=43 // pred_check_branch
          %447 = sbr.rel (%p445) target = $region48
        $region47: #{tpu_custom_call.1} parent=43 // pred_region
          %p448 = scmp.lt.s32.totalorder %s18, 1
          %s449 = scalar_select %p448, %s18, 1
          %s450 = smul.addr %s449, 4
          %s451 = smul.addr %s450, 8
          %s452 = scalar_lea.vmem %s2, %s451
        $region48: #{tpu_custom_call.1} parent=43 // pred_fallthru
          _
      $region44: #{tpu_custom_call.1} parent=5 // pred_fallthru
        _
    $region6: #{tpu_custom_call.1} parent=1 // loop_footer
      %s16 = sadd.s32 1, %s12
    $region7: #{tpu_custom_call.1} parent=1 // loop_footer_branch
      %11 = sbr.rel target = $region3
    $region8: #{tpu_custom_call.1} parent=1 // loop_exit
      _
    %453 = vsyncpa [#allocation3], 1
    %s454 = scalar_lea.sflag [#allocation3], 1
    %455 = vsyncpa %s454, 1
    %456 = vsyncpa [#allocation5], 1

</llo_original>
